<compile_context>
chip_gen: v5e
topology: v5e:2x2
jax: 0.10.0
libtpu: 0.0.40
codegen_flags: <defaults>
</compile_context>

<pallas_src>
import functools

import jax
import jax.numpy as jnp
from jax import lax
from jax.experimental import pallas as pl
from jax.experimental.pallas import tpu as pltpu


def _round_up(x, m):
    return -(-x // m) * m


# ----------------------------------------------------------------------------
# Parameter construction (deterministic, PyTorch-shaped weights).
# ----------------------------------------------------------------------------
def make_batch_conv(num_feat, channel_size, lookback, kernel_size, peek, key):
    keys = jax.random.split(key, 16)
    kidx = 0

    def uniform(shape, fan_in):
        nonlocal kidx
        bound = 1.0 / float(fan_in) ** 0.5
        k = keys[kidx]
        kidx += 1
        return jax.random.uniform(k, shape, jnp.float32, -bound, bound)

    # conv0: Conv2d(1, channel_size, kernel_size=(1, num_feat))
    w0 = uniform((channel_size, 1, 1, num_feat), 1 * num_feat)
    b0 = uniform((channel_size,), 1 * num_feat)

    conv_ws, conv_bs = [], []
    c, L = channel_size, lookback
    while True:
        nc, nL = c // 2, L - kernel_size + 1
        if nc > 0 and nL > 0:
            conv_ws.append(uniform((nc, c, kernel_size, 1), c * kernel_size))
            conv_bs.append(uniform((nc,), c * kernel_size))
            c, L = nc, nL
        else:
            break

    wf = uniform((peek, L * c), L * c)
    bf = uniform((peek,), L * c)
    return dict(
        w0=w0, b0=b0, conv_ws=conv_ws, conv_bs=conv_bs, wf=wf, bf=bf,
        final_c=c, final_L=L, kernel_size=kernel_size,
        channel_size=channel_size, lookback=lookback,
        num_feat=num_feat, peek=peek,
    )


# ----------------------------------------------------------------------------
# Pure-linear-algebra forward on a flattened sample (used only at pack time to
# fold the network into a single affine map; exact same math as the module).
# ----------------------------------------------------------------------------
def _apply_network_flat(x_flat, p):
    L0, F = p["lookback"], p["num_feat"]
    C0 = p["channel_size"]
    x = x_flat.reshape(L0, F)
    # conv0 with kernel (1, num_feat) == matmul over the feature axis.
    h = x @ p["w0"].reshape(C0, F).T + p["b0"][None, :]           # (L0, C0)
    # Each (k, 1) conv == sum of k shifted matmuls.
    for w, b in zip(p["conv_ws"], p["conv_bs"]):
        c_out, c_in, kk, _ = w.shape
        l_out = h.shape[0] - kk + 1
        acc = jnp.broadcast_to(b[None, :], (l_out, c_out))
        for dk in range(kk):
            acc = acc + h[dk:dk + l_out, :] @ w[:, :, dk, 0].T
        h = acc                                                   # (l_out, c_out)
    # torch.flatten of (1, C_f, L_f, 1): index = c * L_f + l.
    flat = jnp.transpose(h).reshape(-1)
    return p["wf"] @ flat + p["bf"]


# ----------------------------------------------------------------------------
# Host-side folding: one lane-padded (K_pad + 8, 128) f32 buffer holding the
# composed affine map A (rows 0..K_pad) and its bias (row K_pad).
# ----------------------------------------------------------------------------
def fold_batch_conv_params(p):
    K = int(p["lookback"] * p["num_feat"])
    peek = int(p["peek"])

    bias = _apply_network_flat(jnp.zeros((K,), jnp.float32), p)          # (peek,)
    eye = jnp.eye(K, dtype=jnp.float32)
    A = jax.vmap(lambda e: _apply_network_flat(e, p) - bias)(eye)        # (K, peek)

    k_pad = _round_up(max(K, 128), 128)
    n_pad = _round_up(max(peek, 128), 128)
    a_pad = jnp.zeros((k_pad, n_pad), jnp.float32).at[:K, :peek].set(A)
    b_rows = jnp.zeros((8, n_pad), jnp.float32).at[0, :peek].set(bias)
    packed = jnp.concatenate([a_pad, b_rows], axis=0)        # (k_pad + 8, n_pad)

    meta = dict(k_in=K, k_pad=k_pad, n_pad=n_pad, peek=peek)
    return packed, meta


# ----------------------------------------------------------------------------
# Pallas kernel: one lane-dense GEMM per batch tile; weights VMEM-resident.
# ----------------------------------------------------------------------------
def _folded_affine_kernel(k_pad, x_ref, w_ref, o_ref):
    a = w_ref[0:k_pad, :]                       # (k_pad, 128) folded weights
    b = w_ref[k_pad:k_pad + 1, :]               # (1, 128) folded bias
    o_ref[...] = jnp.dot(x_ref[...], a, preferred_element_type=jnp.float32) + b


# ----------------------------------------------------------------------------
# Wrappers.
# ----------------------------------------------------------------------------
def batch_conv_forward_batched(x_blf, packed, meta, tb=256):
    """x_blf: (B, lookback, num_feat) -> (B, peek)."""
    B = x_blf.shape[0]
    K, k_pad, n_pad = meta["k_in"], meta["k_pad"], meta["n_pad"]

    # Lane-dense input layout: (B, L0*F), zero-padded to a 128-multiple K.
    x2 = x_blf.reshape(B, K).astype(jnp.float32)
    if k_pad != K:
        x2 = jnp.pad(x2, ((0, 0), (0, k_pad - K)))

    # Batch tiling: TB rows per grid step (multiple of 8), tail zero-padded.
    tb_eff = min(_round_up(B, 8), _round_up(tb, 8))
    b_pad = _round_up(B, tb_eff)
    if b_pad != B:
        x2 = jnp.pad(x2, ((0, b_pad - B), (0, 0)))

    kernel = functools.partial(_folded_affine_kernel, k_pad)
    out = pl.pallas_call(
        kernel,
        out_shape=jax.ShapeDtypeStruct((b_pad, n_pad), jnp.float32),
        grid=(b_pad // tb_eff,),
        in_specs=[
            pl.BlockSpec((tb_eff, k_pad), lambda i: (i, 0)),
            # Constant index_map -> packed weights stay VMEM-resident, one DMA.
            pl.BlockSpec(packed.shape, lambda i: (0, 0)),
        ],
        out_specs=pl.BlockSpec((tb_eff, n_pad), lambda i: (i, 0)),
        compiler_params=pltpu.CompilerParams(
            dimension_semantics=("parallel",)),
    )(x2, packed)
    return out[:B, :meta["peek"]]


def batch_conv_forward(x_nchw, params, packed=None, meta=None):
    """Faithful module signature: x is (1, 1, lookback, num_feat) -> (peek,)."""
    if packed is None or meta is None:
        packed, meta = fold_batch_conv_params(params)
    L0, F = params["lookback"], params["num_feat"]
    x = x_nchw.reshape(1, L0, F)
    return batch_conv_forward_batched(x, packed, meta)[0]


# ----------------------------------------------------------------------------
# Pure-JAX reference (true conv semantics) for verification.
# ----------------------------------------------------------------------------
def ref_forward(x_nchw, p):
    dn = ("NCHW", "OIHW", "NCHW")
    y = lax.conv_general_dilated(x_nchw, p["w0"], (1, 1), "VALID",
                                 dimension_numbers=dn)
    y = y + p["b0"][None, :, None, None]
    for w, b in zip(p["conv_ws"], p["conv_bs"]):
        y = lax.conv_general_dilated(y, w, (1, 1), "VALID",
                                     dimension_numbers=dn)
        y = y + b[None, :, None, None]
    flat = y.reshape(-1)
    return p["wf"] @ flat + p["bf"]


if __name__ == "__main__":
    # Small config implied by the module: x is (1, 1, lookback, num_feat).
    num_feat, channel_size, lookback, kernel_size, peek = 8, 8, 16, 3, 4

    key = jax.random.PRNGKey(0)
    kparams, kx, kb = jax.random.split(key, 3)
    params = make_batch_conv(num_feat, channel_size, lookback, kernel_size,
                             peek, kparams)
    packed, meta = fold_batch_conv_params(params)

    # 1) Faithful single-sample forward (module's own input shape).
    x = jax.random.normal(kx, (1, 1, lookback, num_feat), jnp.float32)
    out = batch_conv_forward(x, params, packed, meta)
    jax.block_until_ready(out)
    ref = ref_forward(x, params)
    assert out.shape == (peek,)
    assert jnp.allclose(out, ref, atol=1e-4, rtol=1e-4), (out, ref)

    # 2) Batched path with a batch that is NOT a multiple of the tile size,
    #    exercising the zero-padded tail + lane-dense GEMM.
    B = 13
    xb = jax.random.normal(kb, (B, lookback, num_feat), jnp.float32)
    outb = batch_conv_forward_batched(xb, packed, meta)
    jax.block_until_ready(outb)
    refb = jnp.stack([
        ref_forward(xb[i].reshape(1, 1, lookback, num_feat), params)
        for i in range(B)
    ])
    assert outb.shape == (B, peek)
    assert jnp.allclose(outb, refb, atol=1e-4, rtol=1e-4), (outb, refb)

    print("KERNEL_OK")
</pallas_src>

<mosaic_0001>
module attributes {stable_mosaic.version = 11 : i64} {
  func.func @_folded_affine_kernel(%arg0: i32, %arg1: memref<8x128xf32, #tpu.memory_space<vmem>>, %arg2: memref<136x128xf32, #tpu.memory_space<vmem>>, %arg3: memref<8x128xf32, #tpu.memory_space<vmem>>) attributes {dimension_semantics = [#tpu.dimension_semantics<parallel>], iteration_bounds = array<i64: 1>, scalar_prefetch = 0 : i64, scratch_operands = 0 : i64, tpu.core_type = #tpu.core_type<tc>, window_params = [{transform_indices = @transform_0, window_bounds = array<i64: 8, 128>}, {pipeline_mode = #tpu.pipeline_mode<synchronous>, transform_indices = @transform_1, window_bounds = array<i64: 136, 128>}, {transform_indices = @transform_2, window_bounds = array<i64: 8, 128>}]} {
    %c0 = arith.constant 0 : index
    %c0_0 = arith.constant 0 : index
    %0 = vector.load %arg2[%c0, %c0_0] : memref<136x128xf32, #tpu.memory_space<vmem>>, vector<128x128xf32>
    %c128 = arith.constant 128 : index
    %c0_1 = arith.constant 0 : index
    %1 = vector.load %arg2[%c128, %c0_1] : memref<136x128xf32, #tpu.memory_space<vmem>>, vector<1x128xf32>
    %c0_2 = arith.constant 0 : index
    %c0_3 = arith.constant 0 : index
    %2 = vector.load %arg1[%c0_2, %c0_3] : memref<8x128xf32, #tpu.memory_space<vmem>>, vector<8x128xf32>
    %cst = arith.constant dense<0.000000e+00> : vector<8x128xf32>
    %3 = tpu.matmul %2, %0, %cst {dimension_numbers = #tpu.dot_dimension_numbers<[1], [0], [0], [1], [0, 0, 1, 1], [], []>} : vector<8x128xf32>, vector<128x128xf32>, vector<8x128xf32> -> vector<8x128xf32>
    %4 = vector.broadcast %1 : vector<1x128xf32> to vector<8x128xf32>
    %5 = arith.addf %3, %4 : vector<8x128xf32>
    %c0_4 = arith.constant 0 : index
    %c0_5 = arith.constant 0 : index
    %6 = vector.load %arg3[%c0_4, %c0_5] : memref<8x128xf32, #tpu.memory_space<vmem>>, vector<8x128xf32>
    tpu.vector_store %arg3[%c0_4, %c0_5], %5 {strides = array<i32>} : memref<8x128xf32, #tpu.memory_space<vmem>>, vector<8x128xf32>,
    return
  }
  func.func @transform_0(%arg0: i32) -> (i32, i32) {
    %c0_i32 = arith.constant 0 : i32
    %c0_i32_0 = arith.constant 0 : i32
    return %arg0, %c0_i32 : i32, i32
  }
  func.func @transform_1(%arg0: i32) -> (i32, i32) {
    %c0_i32 = arith.constant 0 : i32
    %c0_i32_0 = arith.constant 0 : i32
    %c0_i32_1 = arith.constant 0 : i32
    return %c0_i32, %c0_i32_0 : i32, i32
  }
  func.func @transform_2(%arg0: i32) -> (i32, i32) {
    %c0_i32 = arith.constant 0 : i32
    %c0_i32_0 = arith.constant 0 : i32
    return %arg0, %c0_i32 : i32, i32
  }
}

</mosaic_0001>

<llo_original>
// kernel: tpu_custom_call.1
$region0: #{tpu_custom_call.1}
  #allocation0 [shape = 'u32[]', space=smem, size = 0x4, offset = 0x4, fixed_abs, tag = 'smem constant byte address 0x4 - core index']
  #allocation1 [shape = 'u32[72,128]{1,0:T(1,128)}', space=vmem, size = 0x9000, scoped, tag = 'internal scratch']
  %s0 = inlined_call_operand.hbm [shape: f32[8,128], index: 0, kind: input, shape index: {}]
  %s1 = inlined_call_operand.hbm [shape: f32[136,128], index: 1, kind: input, shape index: {}]
  %s2 = inlined_call_operand.hbm [shape: f32[8,128], index: 2, kind: output, shape index: {}]
  %s3 = sld [smem:[#allocation0]]
  $region26: #{tpu_custom_call.1} parent=0
    _
  %s5 = ssub.s32 1, %s3
  %s6 = scalar_select 0, %s5, %s3
  $region1: #{tpu_custom_call.1} parent=0
    #allocation2 [shape = 'u8[4096]{0}', space=vmem, size = 0x1000, scoped, tag = 'input window, operand 0, single buffered']
    #allocation3 [shape = 's32[1]{0}', space=sflag, size = 0x4, scoped, tag = 'scoped memory for tpu_custom_call.1']
    #allocation4 [shape = 's32[1]{0}', space=sflag, size = 0x4, scoped, tag = 'scoped memory for tpu_custom_call.1']
    #allocation5 [shape = 'u8[69632]{0}', space=vmem, size = 0x11000, scoped, tag = 'input window, operand 1, single buffered']
    #allocation6 [shape = 's32[1]{0}', space=sflag, size = 0x4, scoped, tag = 'scoped memory for tpu_custom_call.1']
    #allocation7 [shape = 'u8[4096]{0}', space=vmem, size = 0x1000, scoped, tag = 'output window, operand 0, single buffered']
    %7 = vsyncpa [#allocation3], 0
    %8 = vsyncpa [#allocation6], 0
    %9 = vsyncpa [#allocation4], 0
    // Predicated region
    $region2: #{tpu_custom_call.1} parent=1 // pred_check
      _
    $region3: #{tpu_custom_call.1} parent=1 // pred_check_branch
      %11 = sbr.rel (0) target = $region5
    $region4: #{tpu_custom_call.1} parent=1 // pred_region
      %13 = vsyncadd [#allocation3], 0
      %s15 = sshll.u32 %s0, 4
      %s16 = int_to_ptr.hbm [resolvable:$true] %s15
      %s17 = sshll.u32 [#allocation2], 4
      %s18 = int_to_ptr.vmem [resolvable:$true] %s17
      %20 = dma.hbm_to_vmem [thread:$0]  %s16, 128, %s18, [#allocation3]
    $region5: #{tpu_custom_call.1} parent=1 // pred_fallthru
      _
    // Predicated region
    $region6: #{tpu_custom_call.1} parent=1 // pred_check
      _
    $region7: #{tpu_custom_call.1} parent=1 // pred_check_branch
      %22 = sbr.rel (0) target = $region9
    $region8: #{tpu_custom_call.1} parent=1 // pred_region
      %24 = vsyncadd [#allocation6], 0
      %s25 = sshll.u32 %s1, 4
      %s26 = int_to_ptr.hbm [resolvable:$true] %s25
      %s27 = sshll.u32 [#allocation5], 4
      %s28 = int_to_ptr.vmem [resolvable:$true] %s27
      %33 = dma.hbm_to_vmem [thread:$0]  %s26, 2176, %s28, [#allocation6], 128, 128, 8
    $region9: #{tpu_custom_call.1} parent=1 // pred_fallthru
      _
    // Predicated region
    $region10: #{tpu_custom_call.1} parent=1 // pred_check
      _
    $region11: #{tpu_custom_call.1} parent=1 // pred_check_branch
      %35 = sbr.rel (0) target = $region13
    $region12: #{tpu_custom_call.1} parent=1 // pred_region
      %37 = dma.done [#allocation3], 128
    $region13: #{tpu_custom_call.1} parent=1 // pred_fallthru
      _
    // Predicated region
    $region14: #{tpu_custom_call.1} parent=1 // pred_check
      _
    $region15: #{tpu_custom_call.1} parent=1 // pred_check_branch
      %39 = sbr.rel (0) target = $region17
    $region16: #{tpu_custom_call.1} parent=1 // pred_region
      %41 = dma.done [#allocation6], 2176
    $region17: #{tpu_custom_call.1} parent=1 // pred_fallthru
      _
    %v42 = vld [vmem:[#allocation5] sm:$0xff]
    %v43 = vld [vmem:[#allocation5 + $0x8] sm:$0xff]
    %v44 = vld [vmem:[#allocation5 + $0x10] sm:$0xff]
    %v45 = vld [vmem:[#allocation5 + $0x18] sm:$0xff]
    %v46 = vld [vmem:[#allocation5 + $0x20] sm:$0xff]
    %v47 = vld [vmem:[#allocation5 + $0x28] sm:$0xff]
    %v48 = vld [vmem:[#allocation5 + $0x30] sm:$0xff]
    %v49 = vld [vmem:[#allocation5 + $0x38] sm:$0xff]
    %v50 = vld [vmem:[#allocation5 + $0x40] sm:$0xff]
    %v51 = vld [vmem:[#allocation5 + $0x48] sm:$0xff]
    %v52 = vld [vmem:[#allocation5 + $0x50] sm:$0xff]
    %v53 = vld [vmem:[#allocation5 + $0x58] sm:$0xff]
    %v54 = vld [vmem:[#allocation5 + $0x60] sm:$0xff]
    %v55 = vld [vmem:[#allocation5 + $0x68] sm:$0xff]
    %v56 = vld [vmem:[#allocation5 + $0x70] sm:$0xff]
    %v57 = vld [vmem:[#allocation5 + $0x78] sm:$0xff]
    %v58 = vld [vmem:[#allocation5 + $0x80] sm:$0x1]
    %v59 = vld [vmem:[#allocation2] sm:$0xff]
    %v60 = vperm.slane %v58, 0
    %61 = vmatpush.msra.mxu0 %v57
    %62 = vmatpush.msra.mxu0 %v56
    %63 = vmatpush.msra.mxu0 %v55
    %64 = vmatpush.msra.mxu0 %v54
    %65 = vmatpush.msra.mxu0 %v53
    %66 = vmatpush.msra.mxu0 %v52
    %67 = vmatpush.msra.mxu0 %v51
    %68 = vmatpush.msra.mxu0 %v50
    %69 = vmatpush.msra.mxu0 %v49
    %70 = vmatpush.msra.mxu0 %v48
    %71 = vmatpush.msra.mxu0 %v47
    %72 = vmatpush.msra.mxu0 %v46
    %73 = vmatpush.msra.mxu0 %v45
    %74 = vmatpush.msra.mxu0 %v44
    %75 = vmatpush.msra.mxu0 %v43
    %76 = vmatpush.msra.mxu0 %v42
    %77 = vmatmul.f32.gmra.mxu0 %v59
    %v78 = vpop.f32.mrf.mxu0
    %v79 = vadd.f32 %v60, %v78
    %80 = vdwg.mxu0
    %81 = vst [vmem:[#allocation7] sm:$0xff] %v79
    // Predicated region
    $region18: #{tpu_custom_call.1} parent=1 // pred_check
      _
    $region19: #{tpu_custom_call.1} parent=1 // pred_check_branch
      %83 = sbr.rel (0) target = $region21
    $region20: #{tpu_custom_call.1} parent=1 // pred_region
      %85 = vsyncadd [#allocation4], 0
      %s87 = sshll.u32 [#allocation7], 4
      %s88 = int_to_ptr.vmem [resolvable:$true] %s87
      %s89 = sshll.u32 %s2, 4
      %s90 = int_to_ptr.hbm [resolvable:$true] %s89
      %92 = dma.vmem_to_hbm [thread:$0]  %s88, 128, %s90, [#allocation4]
    $region21: #{tpu_custom_call.1} parent=1 // pred_fallthru
      _
    // Predicated region
    $region22: #{tpu_custom_call.1} parent=1 // pred_check
      _
    $region23: #{tpu_custom_call.1} parent=1 // pred_check_branch
      %94 = sbr.rel (0) target = $region25
    $region24: #{tpu_custom_call.1} parent=1 // pred_region
      %96 = dma.done [#allocation4], 128
    $region25: #{tpu_custom_call.1} parent=1 // pred_fallthru
      _
    %97 = vsyncpa [#allocation3], 1
    %98 = vsyncpa [#allocation6], 1
    %99 = vsyncpa [#allocation4], 1

</llo_original>
